<compile_context>
chip_gen: v6e
topology: v6e:2x2x1
jax: 0.10.0
libtpu: 0.0.40
codegen_flags: <defaults>
</compile_context>

<pallas_src>
import functools

import jax
import jax.numpy as jnp
from jax import lax
from jax.experimental import pallas as pl
from jax.experimental.pallas import tpu as pltpu


def _round_up(x, m):
    return ((x + m - 1) // m) * m


# --------------------------------------------------------------------------
# Kernel
# --------------------------------------------------------------------------
def make_policy_kernel(num_action, compute_dtype):
    """Kernel over one (TB, D_PAD) batch tile.  Two fused matmuls + softmax."""

    def kernel(x_ref, w1_ref, b1_ref, w2_ref, b2_ref, out_ref):
        # ---- fused first layer: [actor hidden | critic hidden] ----
        x = x_ref[...].astype(compute_dtype)                      # (TB, D_PAD)
        h = jnp.dot(x, w1_ref[...].astype(compute_dtype),
                    preferred_element_type=jnp.float32) + b1_ref[...]
        h = jnp.maximum(h, 0.0)                                   # (TB, H_PAD)

        # ---- fused second layer (block diagonal): [logits | value] ----
        z = jnp.dot(h.astype(compute_dtype), w2_ref[...].astype(compute_dtype),
                    preferred_element_type=jnp.float32) + b2_ref[...]
        # z: (TB, OUT_PAD); cols [0, num_action) = logits, col num_action = value

        # ---- masked softmax over the action lanes (f32 math) ----
        col = lax.broadcasted_iota(jnp.int32, z.shape, 1)
        act_mask = col < num_action
        logits = jnp.where(act_mask, z, -jnp.inf)
        m = jnp.max(logits, axis=-1, keepdims=True)
        e = jnp.exp(logits - m)                                   # padded lanes -> 0
        denom = jnp.sum(e, axis=-1, keepdims=True)
        probs = e * pl.reciprocal(denom, approx=True)

        # ---- single lane-dense output slab: probs | value | zeros ----
        out_ref[...] = jnp.where(
            act_mask, probs, jnp.where(col == num_action, z, 0.0))

    return kernel


# --------------------------------------------------------------------------
# Parameter packing: fuse + pad to lane-dense shapes
# --------------------------------------------------------------------------
def pack_params(params, dim_obs, fc1, num_action):
    """Builds fused, zero-padded weights.

    W1: (D_PAD, H_PAD)   = [wp | wv]              (affine_p / affine_v)
    W2: (H_PAD, OUT_PAD) = block-diag(wa, wvh)    (action_head / value_head)
    """
    wp, bp, wa, ba, wv, bv, wvh, bvh = params
    d_pad = _round_up(dim_obs, 128)
    h_pad = _round_up(2 * fc1, 128)
    out_pad = _round_up(num_action + 1, 128)

    w1 = jnp.zeros((d_pad, h_pad), jnp.float32)
    w1 = w1.at[:dim_obs, :fc1].set(wp).at[:dim_obs, fc1:2 * fc1].set(wv)
    b1 = jnp.zeros((1, h_pad), jnp.float32)
    b1 = b1.at[0, :fc1].set(bp).at[0, fc1:2 * fc1].set(bv)

    w2 = jnp.zeros((h_pad, out_pad), jnp.float32)
    w2 = w2.at[:fc1, :num_action].set(wa)
    w2 = w2.at[fc1:2 * fc1, num_action].set(wvh[:, 0])
    b2 = jnp.zeros((1, out_pad), jnp.float32)
    b2 = b2.at[0, :num_action].set(ba).at[0, num_action].set(bvh[0])

    return w1, b1, w2, b2


# --------------------------------------------------------------------------
# Wrappers
# --------------------------------------------------------------------------
def policy_forward_batched(x, packed, num_action, compute_dtype=jnp.float32):
    """x: (B, dim_obs) f32.  Returns (probs (B, num_action), values (B, 1))."""
    w1, b1, w2, b2 = packed
    b_sz, dim_obs = x.shape
    d_pad, h_pad = w1.shape
    out_pad = w2.shape[1]

    # Batch tile: multiple of 8 sublanes, up to 128 rows (MXU height).
    tb = min(128, _round_up(b_sz, 8))
    b_pad = _round_up(b_sz, tb)

    xp = jnp.zeros((b_pad, d_pad), jnp.float32).at[:b_sz, :dim_obs].set(x)

    kernel = make_policy_kernel(num_action, compute_dtype)
    out = pl.pallas_call(
        kernel,
        out_shape=jax.ShapeDtypeStruct((b_pad, out_pad), jnp.float32),
        grid=(b_pad // tb,),
        in_specs=[
            pl.BlockSpec((tb, d_pad), lambda i: (i, 0)),       # x tile
            pl.BlockSpec((d_pad, h_pad), lambda i: (0, 0)),    # fused W1 (resident)
            pl.BlockSpec((1, h_pad), lambda i: (0, 0)),        # fused b1
            pl.BlockSpec((h_pad, out_pad), lambda i: (0, 0)),  # fused W2 (resident)
            pl.BlockSpec((1, out_pad), lambda i: (0, 0)),      # fused b2
        ],
        out_specs=pl.BlockSpec((tb, out_pad), lambda i: (i, 0)),
        compiler_params=pltpu.CompilerParams(
            dimension_semantics=("parallel",)),
    )(xp, w1, b1, w2, b2)

    probs = out[:b_sz, :num_action]
    values = out[:b_sz, num_action:num_action + 1]
    return probs, values


def policy_forward(x, packed, num_action, compute_dtype=jnp.float32):
    """Single-observation forward matching PyTorch Policy.forward on a 1-D x."""
    probs, values = policy_forward_batched(
        x[None, :], packed, num_action, compute_dtype)
    return probs[0], values[0]


# --------------------------------------------------------------------------
# PyTorch-Linear-style init (weights stored transposed: (in, out))
# --------------------------------------------------------------------------
def init_params(key, dim_obs, fc1, num_action):
    ks = jax.random.split(key, 8)

    def lin(kw, kb, fan_in, fan_out):
        bound = 1.0 / jnp.sqrt(jnp.float32(fan_in))
        w = jax.random.uniform(kw, (fan_in, fan_out), jnp.float32, -bound, bound)
        b = jax.random.uniform(kb, (fan_out,), jnp.float32, -bound, bound)
        return w, b

    wp, bp = lin(ks[0], ks[1], dim_obs, fc1)        # affine_p
    wa, ba = lin(ks[2], ks[3], fc1, num_action)     # action_head
    wv, bv = lin(ks[4], ks[5], dim_obs, fc1)        # affine_v
    wvh, bvh = lin(ks[6], ks[7], fc1, 1)            # value_head
    return (wp, bp, wa, ba, wv, bv, wvh, bvh)


def ref_forward_batched(x, params):
    """Pure-JAX reference (per-row PyTorch forward)."""
    wp, bp, wa, ba, wv, bv, wvh, bvh = params
    xp = jnp.maximum(x @ wp + bp, 0.0)
    probs = jax.nn.softmax(xp @ wa + ba, axis=-1)
    xv = jnp.maximum(x @ wv + bv, 0.0)
    vals = xv @ wvh + bvh
    return probs, vals


if __name__ == "__main__":
    dim_obs, fc1, num_action = 64, 32, 16
    batch = 8

    key = jax.random.PRNGKey(0)
    k_params, k_x = jax.random.split(key)
    params = init_params(k_params, dim_obs, fc1, num_action)
    packed = pack_params(params, dim_obs, fc1, num_action)
    x = jax.random.normal(k_x, (batch, dim_obs), jnp.float32)

    # compute_dtype=jnp.bfloat16 is the recommended setting on v6e/v7x; the
    # demo uses f32 so results can be checked tightly against the reference.
    fwd = jax.jit(functools.partial(
        policy_forward_batched, packed=packed, num_action=num_action,
        compute_dtype=jnp.float32))

    action_prob, state_value = fwd(x)
    jax.block_until_ready((action_prob, state_value))

    # ---- correctness checks ----
    ref_prob, ref_val = ref_forward_batched(x, params)
    assert action_prob.shape == (batch, num_action)
    assert state_value.shape == (batch, 1)
    assert jnp.allclose(action_prob, ref_prob, rtol=2e-3, atol=2e-3), "probs mismatch"
    assert jnp.allclose(state_value, ref_val, rtol=1e-4, atol=1e-4), "value mismatch"
    row_sums = jnp.sum(action_prob, axis=-1)
    assert jnp.max(jnp.abs(row_sums - 1.0)) < 5e-3, "probs do not sum to 1"

    # ---- single-observation path (exact PyTorch forward(x) semantics) ----
    p1, v1 = policy_forward(x[0], packed, num_action)
    jax.block_until_ready((p1, v1))
    assert p1.shape == (num_action,) and v1.shape == (1,)
    assert jnp.allclose(p1, ref_prob[0], rtol=2e-3, atol=2e-3)

    print("KERNEL_OK")
</pallas_src>

<mosaic_0001>
module attributes {stable_mosaic.version = 11 : i64} {
  func.func @kernel(%arg0: i32, %arg1: memref<8x128xf32, #tpu.memory_space<vmem>>, %arg2: memref<128x128xf32, #tpu.memory_space<vmem>>, %arg3: memref<1x128xf32, #tpu.memory_space<vmem>>, %arg4: memref<128x128xf32, #tpu.memory_space<vmem>>, %arg5: memref<1x128xf32, #tpu.memory_space<vmem>>, %arg6: memref<8x128xf32, #tpu.memory_space<vmem>>) attributes {dimension_semantics = [#tpu.dimension_semantics<parallel>], iteration_bounds = array<i64: 1>, scalar_prefetch = 0 : i64, scratch_operands = 0 : i64, tpu.core_type = #tpu.core_type<tc>, window_params = [{transform_indices = @transform_0, window_bounds = array<i64: 8, 128>}, {pipeline_mode = #tpu.pipeline_mode<synchronous>, transform_indices = @transform_1, window_bounds = array<i64: 128, 128>}, {pipeline_mode = #tpu.pipeline_mode<synchronous>, transform_indices = @transform_2, window_bounds = array<i64: 1, 128>}, {pipeline_mode = #tpu.pipeline_mode<synchronous>, transform_indices = @transform_3, window_bounds = array<i64: 128, 128>}, {pipeline_mode = #tpu.pipeline_mode<synchronous>, transform_indices = @transform_4, window_bounds = array<i64: 1, 128>}, {transform_indices = @transform_5, window_bounds = array<i64: 8, 128>}]} {
    %c0 = arith.constant 0 : index
    %c0_0 = arith.constant 0 : index
    %0 = vector.load %arg1[%c0, %c0_0] : memref<8x128xf32, #tpu.memory_space<vmem>>, vector<8x128xf32>
    %c0_1 = arith.constant 0 : index
    %c0_2 = arith.constant 0 : index
    %1 = vector.load %arg2[%c0_1, %c0_2] : memref<128x128xf32, #tpu.memory_space<vmem>>, vector<128x128xf32>
    %cst = arith.constant dense<0.000000e+00> : vector<8x128xf32>
    %2 = tpu.matmul %0, %1, %cst {dimension_numbers = #tpu.dot_dimension_numbers<[1], [0], [0], [1], [0, 0, 1, 1], [], []>} : vector<8x128xf32>, vector<128x128xf32>, vector<8x128xf32> -> vector<8x128xf32>
    %c0_3 = arith.constant 0 : index
    %c0_4 = arith.constant 0 : index
    %3 = vector.load %arg3[%c0_3, %c0_4] : memref<1x128xf32, #tpu.memory_space<vmem>>, vector<1x128xf32>
    %4 = vector.broadcast %3 : vector<1x128xf32> to vector<8x128xf32>
    %5 = arith.addf %2, %4 : vector<8x128xf32>
    %cst_5 = arith.constant 0.000000e+00 : f32
    %6 = vector.broadcast %cst_5 : f32 to vector<8x128xf32>
    %7 = arith.maximumf %5, %6 : vector<8x128xf32>
    %c0_6 = arith.constant 0 : index
    %c0_7 = arith.constant 0 : index
    %8 = vector.load %arg4[%c0_6, %c0_7] : memref<128x128xf32, #tpu.memory_space<vmem>>, vector<128x128xf32>
    %cst_8 = arith.constant dense<0.000000e+00> : vector<8x128xf32>
    %9 = tpu.matmul %7, %8, %cst_8 {dimension_numbers = #tpu.dot_dimension_numbers<[1], [0], [0], [1], [0, 0, 1, 1], [], []>} : vector<8x128xf32>, vector<128x128xf32>, vector<8x128xf32> -> vector<8x128xf32>
    %c0_9 = arith.constant 0 : index
    %c0_10 = arith.constant 0 : index
    %10 = vector.load %arg5[%c0_9, %c0_10] : memref<1x128xf32, #tpu.memory_space<vmem>>, vector<1x128xf32>
    %11 = vector.broadcast %10 : vector<1x128xf32> to vector<8x128xf32>
    %12 = arith.addf %9, %11 : vector<8x128xf32>
    %13 = tpu.iota {dimensions = array<i32: 1>} : vector<8x128xi32>
    %c16_i32 = arith.constant 16 : i32
    %14 = vector.broadcast %c16_i32 : i32 to vector<8x128xi32>
    %15 = arith.cmpi slt, %13, %14 : vector<8x128xi32>
    %cst_11 = arith.constant 0xFF800000 : f32
    %16 = vector.broadcast %cst_11 : f32 to vector<8x128xf32>
    %17 = arith.select %15, %12, %16 : vector<8x128xi1>, vector<8x128xf32>
    %cst_12 = arith.constant dense<0xFF800000> : vector<8xf32>
    %18 = vector.multi_reduction <maximumf>, %17, %cst_12 [1] : vector<8x128xf32> to vector<8xf32>
    %19 = vector.shape_cast %18 : vector<8xf32> to vector<8x1xf32>
    %20 = vector.broadcast %19 : vector<8x1xf32> to vector<8x128xf32>
    %21 = arith.subf %17, %20 : vector<8x128xf32>
    %22 = math.exp %21 : vector<8x128xf32>
    %cst_13 = arith.constant dense<0.000000e+00> : vector<8xf32>
    %23 = vector.multi_reduction <add>, %22, %cst_13 [1] : vector<8x128xf32> to vector<8xf32>
    %24 = vector.shape_cast %23 : vector<8xf32> to vector<8x1xf32>
    %25 = tpu.reciprocal %24 {approx = true} : vector<8x1xf32> -> vector<8x1xf32>
    %26 = vector.broadcast %25 : vector<8x1xf32> to vector<8x128xf32>
    %27 = arith.mulf %22, %26 : vector<8x128xf32>
    %c16_i32_14 = arith.constant 16 : i32
    %28 = vector.broadcast %c16_i32_14 : i32 to vector<8x128xi32>
    %29 = arith.cmpi eq, %13, %28 : vector<8x128xi32>
    %cst_15 = arith.constant 0.000000e+00 : f32
    %30 = vector.broadcast %cst_15 : f32 to vector<8x128xf32>
    %31 = arith.select %29, %12, %30 : vector<8x128xi1>, vector<8x128xf32>
    %32 = arith.select %15, %27, %31 : vector<8x128xi1>, vector<8x128xf32>
    %c0_16 = arith.constant 0 : index
    %c0_17 = arith.constant 0 : index
    %33 = vector.load %arg6[%c0_16, %c0_17] : memref<8x128xf32, #tpu.memory_space<vmem>>, vector<8x128xf32>
    tpu.vector_store %arg6[%c0_16, %c0_17], %32 {strides = array<i32>} : memref<8x128xf32, #tpu.memory_space<vmem>>, vector<8x128xf32>,
    return
  }
  func.func @transform_0(%arg0: i32) -> (i32, i32) {
    %c0_i32 = arith.constant 0 : i32
    %c0_i32_0 = arith.constant 0 : i32
    return %arg0, %c0_i32 : i32, i32
  }
  func.func @transform_1(%arg0: i32) -> (i32, i32) {
    %c0_i32 = arith.constant 0 : i32
    %c0_i32_0 = arith.constant 0 : i32
    %c0_i32_1 = arith.constant 0 : i32
    return %c0_i32, %c0_i32_0 : i32, i32
  }
  func.func @transform_2(%arg0: i32) -> (i32, i32) {
    %c0_i32 = arith.constant 0 : i32
    %c0_i32_0 = arith.constant 0 : i32
    %c0_i32_1 = arith.constant 0 : i32
    return %c0_i32, %c0_i32_0 : i32, i32
  }
  func.func @transform_3(%arg0: i32) -> (i32, i32) {
    %c0_i32 = arith.constant 0 : i32
    %c0_i32_0 = arith.constant 0 : i32
    %c0_i32_1 = arith.constant 0 : i32
    return %c0_i32, %c0_i32_0 : i32, i32
  }
  func.func @transform_4(%arg0: i32) -> (i32, i32) {
    %c0_i32 = arith.constant 0 : i32
    %c0_i32_0 = arith.constant 0 : i32
    %c0_i32_1 = arith.constant 0 : i32
    return %c0_i32, %c0_i32_0 : i32, i32
  }
  func.func @transform_5(%arg0: i32) -> (i32, i32) {
    %c0_i32 = arith.constant 0 : i32
    %c0_i32_0 = arith.constant 0 : i32
    return %arg0, %c0_i32 : i32, i32
  }
}

</mosaic_0001>

<llo_original>
// kernel: policy_forward_batched.1
$region0: #{policy_forward_batched.1}
  #allocation0 [shape = 'u32[]', space=smem, size = 0x4, offset = 0x4, fixed_abs, tag = 'smem constant byte address 0x4 - core index']
  #allocation1 [shape = 'u32[144,128]{1,0:T(1,128)}', space=vmem, size = 0x12000, scoped, tag = 'internal scratch']
  %s0 = inlined_call_operand.vmem [shape: f32[8,128], index: 0, kind: input, shape index: {}]
  %s1 = inlined_call_operand.hbm [shape: f32[128,128], index: 1, kind: input, shape index: {}]
  %s2 = inlined_call_operand.vmem [shape: f32[1,128], index: 2, kind: input, shape index: {}]
  %s3 = inlined_call_operand.hbm [shape: f32[128,128], index: 3, kind: input, shape index: {}]
  %s4 = inlined_call_operand.vmem [shape: f32[1,128], index: 4, kind: input, shape index: {}]
  %s5 = inlined_call_operand.vmem [shape: f32[8,128], index: 5, kind: output, shape index: {}]
  %s6 = sld [smem:[#allocation0]]
  $region38: #{policy_forward_batched.1} parent=0
    _
  %s8 = ssub.s32 1, %s6
  %s9 = scalar_select 0, %s8, %s6
  $region1: #{policy_forward_batched.1} parent=0
    #allocation2 [shape = 'u8[65536]{0}', space=vmem, size = 0x10000, scoped, tag = 'input window, operand 1, single buffered']
    #allocation3 [shape = 's32[1]{0}', space=sflag, size = 0x4, scoped, tag = 'scoped memory for policy_forward_batched.1']
    #allocation4 [shape = 'u8[65536]{0}', space=vmem, size = 0x10000, scoped, tag = 'input window, operand 3, single buffered']
    #allocation5 [shape = 's32[1]{0}', space=sflag, size = 0x4, scoped, tag = 'scoped memory for policy_forward_batched.1']
    %10 = vsyncpa [#allocation3], 0
    %11 = vsyncpa [#allocation5], 0
    // Predicated region
    $region2: #{policy_forward_batched.1} parent=1 // pred_check
      _
    $region3: #{policy_forward_batched.1} parent=1 // pred_check_branch
      %13 = sbr.rel (0) target = $region5
    $region4: #{policy_forward_batched.1} parent=1 // pred_region
      _
    $region5: #{policy_forward_batched.1} parent=1 // pred_fallthru
      _
    // Predicated region
    $region6: #{policy_forward_batched.1} parent=1 // pred_check
      _
    $region7: #{policy_forward_batched.1} parent=1 // pred_check_branch
      %15 = sbr.rel (0) target = $region9
    $region8: #{policy_forward_batched.1} parent=1 // pred_region
      %s17 = ssub.s32 2048, 2048
      %18 = vsyncadd [#allocation3], %s17
      %s19 = sshll.u32 [#allocation2], 4
      %s20 = int_to_ptr.vmem [resolvable:$true] %s19
      %25 = dma.hbm_to_vmem [thread:$0]  %s1, 2048, %s20, [#allocation3], 128, 128, 8
    $region9: #{policy_forward_batched.1} parent=1 // pred_fallthru
      _
    // Predicated region
    $region10: #{policy_forward_batched.1} parent=1 // pred_check
      _
    $region11: #{policy_forward_batched.1} parent=1 // pred_check_branch
      %27 = sbr.rel (0) target = $region13
    $region12: #{policy_forward_batched.1} parent=1 // pred_region
      _
    $region13: #{policy_forward_batched.1} parent=1 // pred_fallthru
      _
    // Predicated region
    $region14: #{policy_forward_batched.1} parent=1 // pred_check
      _
    $region15: #{policy_forward_batched.1} parent=1 // pred_check_branch
      %29 = sbr.rel (0) target = $region17
    $region16: #{policy_forward_batched.1} parent=1 // pred_region
      %s31 = ssub.s32 2048, 2048
      %32 = vsyncadd [#allocation5], %s31
      %s33 = sshll.u32 [#allocation4], 4
      %s34 = int_to_ptr.vmem [resolvable:$true] %s33
      %39 = dma.hbm_to_vmem [thread:$0]  %s3, 2048, %s34, [#allocation5], 128, 128, 8
    $region17: #{policy_forward_batched.1} parent=1 // pred_fallthru
      _
    // Predicated region
    $region18: #{policy_forward_batched.1} parent=1 // pred_check
      _
    $region19: #{policy_forward_batched.1} parent=1 // pred_check_branch
      %41 = sbr.rel (0) target = $region21
    $region20: #{policy_forward_batched.1} parent=1 // pred_region
      _
    $region21: #{policy_forward_batched.1} parent=1 // pred_fallthru
      _
    // Predicated region
    $region22: #{policy_forward_batched.1} parent=1 // pred_check
      _
    $region23: #{policy_forward_batched.1} parent=1 // pred_check_branch
      %43 = sbr.rel (0) target = $region25
    $region24: #{policy_forward_batched.1} parent=1 // pred_region
      %44 = dma.done [#allocation3], 2048
    $region25: #{policy_forward_batched.1} parent=1 // pred_fallthru
      _
    // Predicated region
    $region26: #{policy_forward_batched.1} parent=1 // pred_check
      _
    $region27: #{policy_forward_batched.1} parent=1 // pred_check_branch
      %46 = sbr.rel (0) target = $region29
    $region28: #{policy_forward_batched.1} parent=1 // pred_region
      %47 = dma.done [#allocation5], 2048
    $region29: #{policy_forward_batched.1} parent=1 // pred_fallthru
      _
    %v48 = vld [vmem:[%s0] sm:$0xff]
    %v49 = vld [vmem:[#allocation2] sm:$0xff]
    %v50 = vld [vmem:[#allocation2 + $0x8] sm:$0xff]
    %v51 = vld [vmem:[#allocation2 + $0x10] sm:$0xff]
    %v52 = vld [vmem:[#allocation2 + $0x18] sm:$0xff]
    %v53 = vld [vmem:[#allocation2 + $0x20] sm:$0xff]
    %v54 = vld [vmem:[#allocation2 + $0x28] sm:$0xff]
    %v55 = vld [vmem:[#allocation2 + $0x30] sm:$0xff]
    %v56 = vld [vmem:[#allocation2 + $0x38] sm:$0xff]
    %v57 = vld [vmem:[#allocation2 + $0x40] sm:$0xff]
    %v58 = vld [vmem:[#allocation2 + $0x48] sm:$0xff]
    %v59 = vld [vmem:[#allocation2 + $0x50] sm:$0xff]
    %v60 = vld [vmem:[#allocation2 + $0x58] sm:$0xff]
    %v61 = vld [vmem:[#allocation2 + $0x60] sm:$0xff]
    %v62 = vld [vmem:[#allocation2 + $0x68] sm:$0xff]
    %v63 = vld [vmem:[#allocation2 + $0x70] sm:$0xff]
    %v64 = vld [vmem:[#allocation2 + $0x78] sm:$0xff]
    %v65 = vld [vmem:[%s2] sm:$0x1]
    %v67 = vlaneseq
    %v68 = vshrl.u32 %v67, 7
    %v69 = vsub.s32 0, %v68
    %v70 = vrot.slane %v65, %v69
    %72 = vmatprep.subr.mxu0 0.0
    %73 = vmatpush1.msra.mxu0 %v64
    %74 = vmatprep.subr.mxu0 0.0
    %75 = vmatpush1.msra.mxu0 %v63
    %76 = vmatprep.subr.mxu0 0.0
    %77 = vmatpush1.msra.mxu0 %v62
    %78 = vmatprep.subr.mxu0 0.0
    %79 = vmatpush1.msra.mxu0 %v61
    %80 = vmatprep.subr.mxu0 0.0
    %81 = vmatpush1.msra.mxu0 %v60
    %82 = vmatprep.subr.mxu0 0.0
    %83 = vmatpush1.msra.mxu0 %v59
    %84 = vmatprep.subr.mxu0 0.0
    %85 = vmatpush1.msra.mxu0 %v58
    %86 = vmatprep.subr.mxu0 0.0
    %87 = vmatpush1.msra.mxu0 %v57
    %88 = vmatprep.subr.mxu0 0.0
    %89 = vmatpush1.msra.mxu0 %v56
    %90 = vmatprep.subr.mxu0 0.0
    %91 = vmatpush1.msra.mxu0 %v55
    %92 = vmatprep.subr.mxu0 0.0
    %93 = vmatpush1.msra.mxu0 %v54
    %94 = vmatprep.subr.mxu0 0.0
    %95 = vmatpush1.msra.mxu0 %v53
    %96 = vmatprep.subr.mxu0 0.0
    %97 = vmatpush1.msra.mxu0 %v52
    %98 = vmatprep.subr.mxu0 0.0
    %99 = vmatpush1.msra.mxu0 %v51
    %100 = vmatprep.subr.mxu0 0.0
    %101 = vmatpush1.msra.mxu0 %v50
    %102 = vmatprep.subr.mxu0 0.0
    %103 = vmatpush1.msra.mxu0 %v49
    %104 = vmatprep.subr.mxu0 0.0
    %105 = vmatpush2.msra.mxu0 0.0
    %106 = vmatprep.subr.mxu0 0.0
    %107 = vmatpush2.msra.mxu0 0.0
    %108 = vmatprep.subr.mxu0 0.0
    %109 = vmatpush2.msra.mxu0 0.0
    %110 = vmatprep.subr.mxu0 0.0
    %111 = vmatpush2.msra.mxu0 0.0
    %112 = vmatprep.subr.mxu0 0.0
    %113 = vmatpush2.msra.mxu0 0.0
    %114 = vmatprep.subr.mxu0 0.0
    %115 = vmatpush2.msra.mxu0 0.0
    %116 = vmatprep.subr.mxu0 0.0
    %117 = vmatpush2.msra.mxu0 0.0
    %118 = vmatprep.subr.mxu0 0.0
    %119 = vmatpush2.msra.mxu0 0.0
    %120 = vmatprep.subr.mxu0 0.0
    %121 = vmatpush2.msra.mxu0 0.0
    %122 = vmatprep.subr.mxu0 0.0
    %123 = vmatpush2.msra.mxu0 0.0
    %124 = vmatprep.subr.mxu0 0.0
    %125 = vmatpush2.msra.mxu0 0.0
    %126 = vmatprep.subr.mxu0 0.0
    %127 = vmatpush2.msra.mxu0 0.0
    %128 = vmatprep.subr.mxu0 0.0
    %129 = vmatpush2.msra.mxu0 0.0
    %130 = vmatprep.subr.mxu0 0.0
    %131 = vmatpush2.msra.mxu0 0.0
    %132 = vmatprep.subr.mxu0 0.0
    %133 = vmatpush2.msra.mxu0 0.0
    %134 = vmatprep.subr.mxu0 0.0
    %135 = vmatpush2.msra.mxu0 0.0
    %136 = vmatprep.mubr.f32.mxu0 0.0
    %137 = vmatmul.mubr.f32.gmra.mxu0 %v48
    %v138 = vpop.f32.mrf.mxu0
    %v139 = vadd.f32 %v70, %v138
    %v140 = vpop.f32.mrf.mxu0
    %141 = vdwg.mxu0
    %v142 = vmax.f32 %v139, 0.0
    %v143 = vld [vmem:[#allocation4] sm:$0xff]
    %v144 = vld [vmem:[#allocation4 + $0x8] sm:$0xff]
    %v145 = vld [vmem:[#allocation4 + $0x10] sm:$0xff]
    %v146 = vld [vmem:[#allocation4 + $0x18] sm:$0xff]
    %v147 = vld [vmem:[#allocation4 + $0x20] sm:$0xff]
    %v148 = vld [vmem:[#allocation4 + $0x28] sm:$0xff]
    %v149 = vld [vmem:[#allocation4 + $0x30] sm:$0xff]
    %v150 = vld [vmem:[#allocation4 + $0x38] sm:$0xff]
    %v151 = vld [vmem:[#allocation4 + $0x40] sm:$0xff]
    %v152 = vld [vmem:[#allocation4 + $0x48] sm:$0xff]
    %v153 = vld [vmem:[#allocation4 + $0x50] sm:$0xff]
    %v154 = vld [vmem:[#allocation4 + $0x58] sm:$0xff]
    %v155 = vld [vmem:[#allocation4 + $0x60] sm:$0xff]
    %v156 = vld [vmem:[#allocation4 + $0x68] sm:$0xff]
    %v157 = vld [vmem:[#allocation4 + $0x70] sm:$0xff]
    %v158 = vld [vmem:[#allocation4 + $0x78] sm:$0xff]
    %v159 = vld [vmem:[%s4] sm:$0x1]
    %v161 = vlaneseq
    %v162 = vshrl.u32 %v161, 7
    %v163 = vsub.s32 0, %v162
    %v164 = vrot.slane %v159, %v163
    %166 = vmatprep.subr.mxu0 0.0
    %167 = vmatpush1.msra.mxu0 %v158
    %168 = vmatprep.subr.mxu0 0.0
    %169 = vmatpush1.msra.mxu0 %v157
    %170 = vmatprep.subr.mxu0 0.0
    %171 = vmatpush1.msra.mxu0 %v156
    %172 = vmatprep.subr.mxu0 0.0
    %173 = vmatpush1.msra.mxu0 %v155
    %174 = vmatprep.subr.mxu0 0.0
    %175 = vmatpush1.msra.mxu0 %v154
    %176 = vmatprep.subr.mxu0 0.0
    %177 = vmatpush1.msra.mxu0 %v153
    %178 = vmatprep.subr.mxu0 0.0
    %179 = vmatpush1.msra.mxu0 %v152
    %180 = vmatprep.subr.mxu0 0.0
    %181 = vmatpush1.msra.mxu0 %v151
    %182 = vmatprep.subr.mxu0 0.0
    %183 = vmatpush1.msra.mxu0 %v150
    %184 = vmatprep.subr.mxu0 0.0
    %185 = vmatpush1.msra.mxu0 %v149
    %186 = vmatprep.subr.mxu0 0.0
    %187 = vmatpush1.msra.mxu0 %v148
    %188 = vmatprep.subr.mxu0 0.0
    %189 = vmatpush1.msra.mxu0 %v147
    %190 = vmatprep.subr.mxu0 0.0
    %191 = vmatpush1.msra.mxu0 %v146
    %192 = vmatprep.subr.mxu0 0.0
    %193 = vmatpush1.msra.mxu0 %v145
    %194 = vmatprep.subr.mxu0 0.0
    %195 = vmatpush1.msra.mxu0 %v144
    %196 = vmatprep.subr.mxu0 0.0
    %197 = vmatpush1.msra.mxu0 %v143
    %198 = vmatprep.subr.mxu0 0.0
    %199 = vmatpush2.msra.mxu0 0.0
    %200 = vmatprep.subr.mxu0 0.0
    %201 = vmatpush2.msra.mxu0 0.0
    %202 = vmatprep.subr.mxu0 0.0
    %203 = vmatpush2.msra.mxu0 0.0
    %204 = vmatprep.subr.mxu0 0.0
    %205 = vmatpush2.msra.mxu0 0.0
    %206 = vmatprep.subr.mxu0 0.0
    %207 = vmatpush2.msra.mxu0 0.0
    %208 = vmatprep.subr.mxu0 0.0
    %209 = vmatpush2.msra.mxu0 0.0
    %210 = vmatprep.subr.mxu0 0.0
    %211 = vmatpush2.msra.mxu0 0.0
    %212 = vmatprep.subr.mxu0 0.0
    %213 = vmatpush2.msra.mxu0 0.0
    %214 = vmatprep.subr.mxu0 0.0
    %215 = vmatpush2.msra.mxu0 0.0
    %216 = vmatprep.subr.mxu0 0.0
    %217 = vmatpush2.msra.mxu0 0.0
    %218 = vmatprep.subr.mxu0 0.0
    %219 = vmatpush2.msra.mxu0 0.0
    %220 = vmatprep.subr.mxu0 0.0
    %221 = vmatpush2.msra.mxu0 0.0
    %222 = vmatprep.subr.mxu0 0.0
    %223 = vmatpush2.msra.mxu0 0.0
    %224 = vmatprep.subr.mxu0 0.0
    %225 = vmatpush2.msra.mxu0 0.0
    %226 = vmatprep.subr.mxu0 0.0
    %227 = vmatpush2.msra.mxu0 0.0
    %228 = vmatprep.subr.mxu0 0.0
    %229 = vmatpush2.msra.mxu0 0.0
    %230 = vmatprep.mubr.f32.mxu0 0.0
    %231 = vmatmul.mubr.f32.gmra.mxu0 %v142
    %v232 = vpop.f32.mrf.mxu0
    %v233 = vadd.f32 %v164, %v232
    %v234 = vpop.f32.mrf.mxu0
    %235 = vdwg.mxu0
    %v236 = vlaneseq
    %v237 = vand.u32 %v236, 127
    %vm238 = vcmp.lt.s32.totalorder %v237, 16
    %v239 = vsel %vm238, %v233, -inf
    %240 = vmax.xlane.f32.xlu0 %v239
    %v241 = vpop.xlane.xlu0 %240
    %v242 = vsub.f32 %v239, %v241
    %v243 = vmul.f32 %v242, 1.442695
    %v244 = vpow.pop %v243
    %245 = vadd.xlane.f32.xlu0 %v244
    %v246 = vpop.xlane.xlu0 %245
    %v247 = vrcp.pop %v246
    %v248 = vmul.f32 %v244, %v247
    %vm249 = vcmp.eq.s32.totalorder %v237, 16
    %v250 = vsel %vm249, %v233, 0.0
    %v251 = vsel %vm238, %v248, %v250
    %252 = vst [vmem:[%s5] sm:$0xff] %v251
    // Predicated region
    $region30: #{policy_forward_batched.1} parent=1 // pred_check
      _
    $region31: #{policy_forward_batched.1} parent=1 // pred_check_branch
      %254 = sbr.rel (0) target = $region33
    $region32: #{policy_forward_batched.1} parent=1 // pred_region
      _
    $region33: #{policy_forward_batched.1} parent=1 // pred_fallthru
      _
    // Predicated region
    $region34: #{policy_forward_batched.1} parent=1 // pred_check
      _
    $region35: #{policy_forward_batched.1} parent=1 // pred_check_branch
      %256 = sbr.rel (0) target = $region37
    $region36: #{policy_forward_batched.1} parent=1 // pred_region
      _
    $region37: #{policy_forward_batched.1} parent=1 // pred_fallthru
      _
    %257 = vsyncpa [#allocation3], 1
    %258 = vsyncpa [#allocation5], 1

</llo_original>
